<compile_context>
chip_gen: v5e
topology: v5e:2x2
jax: 0.10.0
libtpu: 0.0.40
codegen_flags: <defaults>
</compile_context>

<pallas_src>
import functools

import jax
import jax.numpy as jnp
from jax.experimental import pallas as pl
from jax.experimental.pallas import tpu as pltpu


N_OUT = 10        # real number of classes
N_PAD = 16        # small full-dim last-axis pad (zero-filled, sliced off)
TM_MAX = 1024     # batch-tile cap: 1024*784*4B*2(double buffer) ~= 6.3 MiB


def _round_up(x, m):
    return ((x + m - 1) // m) * m


def linear_kernel(x_ref, w_ref, b_ref, o_ref):
    # x_ref: (TM, 784) f32   w_ref: (784, 16) f32   b_ref: (1, 16) f32
    # o_ref: (TM, 16) f32
    acc = jnp.dot(x_ref[...], w_ref[...],
                  preferred_element_type=jnp.float32)   # f32 MXU matmul
    o_ref[...] = acc + b_ref[...]                       # exact f32 bias add


def prepare_params(w, b, n_pad=N_PAD):
    """One-time parameter prep (hoisted out of the per-call path).

    w: (10, 784) PyTorch nn.Linear layout, b: (10,).
    Returns (w_padded: (784, n_pad) f32, b_padded: (1, n_pad) f32),
    zero-filled in the padded region so results match the unpadded math.
    """
    n, k = w.shape
    w_padded = jnp.zeros((k, n_pad), dtype=jnp.float32)
    w_padded = w_padded.at[:, :n].set(jnp.transpose(w).astype(jnp.float32))
    b_padded = jnp.zeros((1, n_pad), dtype=jnp.float32)
    b_padded = b_padded.at[:, :n].set(b.astype(jnp.float32))
    return w_padded, b_padded


@functools.partial(jax.jit, static_argnames=("n_out",))
def mnist_logistic_forward(x, w_padded, b_padded, n_out=N_OUT):
    """x: (B, 784) f32; w_padded: (784, N_PAD) f32; b_padded: (1, N_PAD) f32."""
    B, K = x.shape
    Np = w_padded.shape[1]

    # Batch tile: for B > 16 split into at least 2 grid steps so the
    # "parallel" axis can shard across both v7x TensorCores; cap at TM_MAX so
    # the double-buffered f32 x tile stays VMEM-friendly everywhere.
    if B <= 16:
        TM = B
    else:
        TM = min(TM_MAX, _round_up(pl.cdiv(B, 2), 8))
    grid = (pl.cdiv(B, TM),)

    out = pl.pallas_call(
        linear_kernel,
        out_shape=jax.ShapeDtypeStruct((B, Np), jnp.float32),
        grid_spec=pltpu.PrefetchScalarGridSpec(
            num_scalar_prefetch=0,
            grid=grid,
            in_specs=[
                pl.BlockSpec((TM, K), lambda i: (i, 0)),   # x tile per step
                pl.BlockSpec((K, Np), lambda i: (0, 0)),   # weight resident
                pl.BlockSpec((1, Np), lambda i: (0, 0)),   # bias resident
            ],
            out_specs=pl.BlockSpec((TM, Np), lambda i: (i, 0)),
        ),
        compiler_params=pltpu.CompilerParams(
            dimension_semantics=("parallel",)),
    )(x, w_padded, b_padded)

    return out[:, :n_out]


if __name__ == "__main__":
    key = jax.random.PRNGKey(0)
    k_x, k_w, k_b = jax.random.split(key, 3)

    bs, in_features, out_features = 64, 784, 10

    # Deterministic "MNIST-like" input batch.
    x = jax.random.uniform(k_x, (bs, in_features), dtype=jnp.float32)

    # nn.Linear(784, 10) default init: U(-1/sqrt(784), 1/sqrt(784))
    bound = 1.0 / (in_features ** 0.5)
    w = jax.random.uniform(k_w, (out_features, in_features),
                           dtype=jnp.float32, minval=-bound, maxval=bound)
    b = jax.random.uniform(k_b, (out_features,),
                           dtype=jnp.float32, minval=-bound, maxval=bound)

    # One-time param prep (transpose + zero-pad), outside the hot path.
    w_padded, b_padded = prepare_params(w, b)

    out = mnist_logistic_forward(x, w_padded, b_padded)
    out = jax.block_until_ready(out)

    # Sanity check against plain f32 JAX reference (all-f32 path -> tight tol).
    ref = x @ w.T + b
    assert out.shape == (bs, out_features)
    assert jnp.allclose(out, ref, atol=1e-3, rtol=1e-3), (
        float(jnp.max(jnp.abs(out - ref))))

    print("KERNEL_OK")
</pallas_src>

<mosaic_0001>
module attributes {stable_mosaic.version = 11 : i64} {
  func.func @linear_kernel(%arg0: i32, %arg1: memref<32x784xf32, #tpu.memory_space<vmem>>, %arg2: memref<784x16xf32, #tpu.memory_space<vmem>>, %arg3: memref<1x16xf32, #tpu.memory_space<vmem>>, %arg4: memref<32x16xf32, #tpu.memory_space<vmem>>) attributes {dimension_semantics = [#tpu.dimension_semantics<parallel>], iteration_bounds = array<i64: 2>, scalar_prefetch = 0 : i64, scratch_operands = 0 : i64, tpu.core_type = #tpu.core_type<tc>, window_params = [{transform_indices = @transform_0, window_bounds = array<i64: 32, 784>}, {pipeline_mode = #tpu.pipeline_mode<synchronous>, transform_indices = @transform_1, window_bounds = array<i64: 784, 16>}, {pipeline_mode = #tpu.pipeline_mode<synchronous>, transform_indices = @transform_2, window_bounds = array<i64: 1, 16>}, {transform_indices = @transform_3, window_bounds = array<i64: 32, 16>}]} {
    %c0 = arith.constant 0 : index
    %c0_0 = arith.constant 0 : index
    %0 = vector.load %arg1[%c0, %c0_0] : memref<32x784xf32, #tpu.memory_space<vmem>>, vector<32x784xf32>
    %c0_1 = arith.constant 0 : index
    %c0_2 = arith.constant 0 : index
    %1 = vector.load %arg2[%c0_1, %c0_2] : memref<784x16xf32, #tpu.memory_space<vmem>>, vector<784x16xf32>
    %cst = arith.constant dense<0.000000e+00> : vector<32x16xf32>
    %2 = tpu.matmul %0, %1, %cst {dimension_numbers = #tpu.dot_dimension_numbers<[1], [0], [0], [1], [0, 0, 1, 1], [], []>} : vector<32x784xf32>, vector<784x16xf32>, vector<32x16xf32> -> vector<32x16xf32>
    %c0_3 = arith.constant 0 : index
    %c0_4 = arith.constant 0 : index
    %3 = vector.load %arg3[%c0_3, %c0_4] : memref<1x16xf32, #tpu.memory_space<vmem>>, vector<1x16xf32>
    %4 = vector.broadcast %3 : vector<1x16xf32> to vector<32x16xf32>
    %5 = arith.addf %2, %4 : vector<32x16xf32>
    %c0_5 = arith.constant 0 : index
    %c0_6 = arith.constant 0 : index
    %6 = vector.load %arg4[%c0_5, %c0_6] : memref<32x16xf32, #tpu.memory_space<vmem>>, vector<32x16xf32>
    tpu.vector_store %arg4[%c0_5, %c0_6], %5 {strides = array<i32>} : memref<32x16xf32, #tpu.memory_space<vmem>>, vector<32x16xf32>,
    return
  }
  func.func @transform_0(%arg0: i32) -> (i32, i32) {
    %c0_i32 = arith.constant 0 : i32
    %c0_i32_0 = arith.constant 0 : i32
    return %arg0, %c0_i32 : i32, i32
  }
  func.func @transform_1(%arg0: i32) -> (i32, i32) {
    %c0_i32 = arith.constant 0 : i32
    %c0_i32_0 = arith.constant 0 : i32
    %c0_i32_1 = arith.constant 0 : i32
    return %c0_i32, %c0_i32_0 : i32, i32
  }
  func.func @transform_2(%arg0: i32) -> (i32, i32) {
    %c0_i32 = arith.constant 0 : i32
    %c0_i32_0 = arith.constant 0 : i32
    %c0_i32_1 = arith.constant 0 : i32
    return %c0_i32, %c0_i32_0 : i32, i32
  }
  func.func @transform_3(%arg0: i32) -> (i32, i32) {
    %c0_i32 = arith.constant 0 : i32
    %c0_i32_0 = arith.constant 0 : i32
    return %arg0, %c0_i32 : i32, i32
  }
}

</mosaic_0001>

<llo_original>
// kernel: mnist_logistic_forward.1
$region0: #{mnist_logistic_forward.1}
  #allocation0 [shape = 'u32[]', space=smem, size = 0x4, offset = 0x4, fixed_abs, tag = 'smem constant byte address 0x4 - core index']
  #allocation1 [shape = 'u32[72,128]{1,0:T(1,128)}', space=vmem, size = 0x9000, scoped, tag = 'internal scratch']
  %s0 = inlined_call_operand.vmem [shape: f32[64,784], index: 0, kind: input, shape index: {}]
  %s1 = inlined_call_operand.vmem [shape: f32[784,16], index: 1, kind: input, shape index: {}]
  %s2 = inlined_call_operand.vmem [shape: f32[1,16], index: 2, kind: input, shape index: {}]
  %s3 = inlined_call_operand.vmem [shape: f32[64,16], index: 3, kind: output, shape index: {}]
  %s4 = sld [smem:[#allocation0]]
  $region45: #{mnist_logistic_forward.1} parent=0
    _
  %s6 = ssub.s32 1, %s4
  %s7 = scalar_select 0, %s6, %s4
  loop: start=0, step=1, limit=4
  $region2: #{mnist_logistic_forward.1} parent=0 // loop_pre_header
    _
  $region3: #{mnist_logistic_forward.1} parent=0 // loop_header
    %s9 = sphi 0, %s13
    %p10 = scmp.ge.s32.totalorder %s9, 4
    %s19 = sphi 0, %s21
    %s22 = sphi 0, %s19
    %s23 = sphi 0, %s22
    %s39 = sphi 0, %s23
    %s43 = sphi 0, %s43
    %s45 = sphi 0, %s43
    %s46 = sphi 0, %s45
    %s60 = sphi 0, %s46
    %s64 = sphi 0, %s64
    %s66 = sphi 0, %s64
    %s67 = sphi 0, %s66
    %s81 = sphi 0, %s67
    %s87 = sphi 0, %s89
    %s90 = sphi 0, %s87
    %s91 = sphi 0, %s90
    %s107 = sphi 0, %s91
  $region4: #{mnist_logistic_forward.1} parent=0 // loop_header_branch
    %12 = sbr.rel (%p10) target = $region8
  $region5: #{mnist_logistic_forward.1} parent=0 // loop_body
    %s14 = ssub.s32 %s9, 1
    %s15 = ssub.s32 %s9, 2
    %s16 = sadd.s32 %s9, 1
    %s17 = ssub.s32 %s9, %s16
    %p18 = scmp.eq.s32.totalorder %s17, 0
    %s20 = sadd.s32 %s19, 1
    %s21 = scalar_select %p18, %s19, %s20
    %p24 = pneg %p18
    %p25 = scmp.eq.s32.totalorder %s9, 1
    %p26 = por %p24, %p25
    %p27 = scmp.ne.s32.totalorder %s19, %s22
    %p28 = scmp.eq.s32.totalorder %s9, 0
    %p29 = por %p27, %p28
    %p30 = scmp.ne.s32.totalorder %s19, %s22
    %p31 = scmp.eq.s32.totalorder %s14, 1
    %p32 = por %p30, %p31
    %p33 = scmp.ne.s32.totalorder %s22, %s23
    %p34 = scmp.eq.s32.totalorder %s14, 0
    %p35 = por %p33, %p34
    %p36 = scmp.ne.s32.totalorder %s22, %s23
    %p37 = scmp.eq.s32.totalorder %s15, 1
    %p38 = por %p36, %p37
    %p40 = scmp.ne.s32.totalorder %s23, %s39
    %p41 = scmp.eq.s32.totalorder %s15, 0
    %p42 = por %p40, %p41
    %s44 = sadd.s32 %s43, 1
    %p47 = scmp.eq.s32.totalorder %s9, 1
    %p48 = scmp.ne.s32.totalorder %s43, %s45
    %p49 = scmp.eq.s32.totalorder %s9, 0
    %p50 = por %p48, %p49
    %p51 = scmp.ne.s32.totalorder %s43, %s45
    %p52 = scmp.eq.s32.totalorder %s14, 1
    %p53 = por %p51, %p52
    %p54 = scmp.ne.s32.totalorder %s45, %s46
    %p55 = scmp.eq.s32.totalorder %s14, 0
    %p56 = por %p54, %p55
    %p57 = scmp.ne.s32.totalorder %s45, %s46
    %p58 = scmp.eq.s32.totalorder %s15, 1
    %p59 = por %p57, %p58
    %p61 = scmp.ne.s32.totalorder %s46, %s60
    %p62 = scmp.eq.s32.totalorder %s15, 0
    %p63 = por %p61, %p62
    %s65 = sadd.s32 %s64, 1
    %p68 = scmp.eq.s32.totalorder %s9, 1
    %p69 = scmp.ne.s32.totalorder %s64, %s66
    %p70 = scmp.eq.s32.totalorder %s9, 0
    %p71 = por %p69, %p70
    %p72 = scmp.ne.s32.totalorder %s64, %s66
    %p73 = scmp.eq.s32.totalorder %s14, 1
    %p74 = por %p72, %p73
    %p75 = scmp.ne.s32.totalorder %s66, %s67
    %p76 = scmp.eq.s32.totalorder %s14, 0
    %p77 = por %p75, %p76
    %p78 = scmp.ne.s32.totalorder %s66, %s67
    %p79 = scmp.eq.s32.totalorder %s15, 1
    %p80 = por %p78, %p79
    %p82 = scmp.ne.s32.totalorder %s67, %s81
    %p83 = scmp.eq.s32.totalorder %s15, 0
    %p84 = por %p82, %p83
    %s85 = ssub.s32 %s9, %s16
    %p86 = scmp.eq.s32.totalorder %s85, 0
    %s88 = sadd.s32 %s87, 1
    %s89 = scalar_select %p86, %s87, %s88
    %p92 = pneg %p86
    %p93 = scmp.eq.s32.totalorder %s9, 1
    %p94 = por %p92, %p93
    %p95 = scmp.ne.s32.totalorder %s87, %s90
    %p96 = scmp.eq.s32.totalorder %s9, 0
    %p97 = por %p95, %p96
    %p98 = scmp.ne.s32.totalorder %s87, %s90
    %p99 = scmp.eq.s32.totalorder %s14, 1
    %p100 = por %p98, %p99
    %p101 = scmp.ne.s32.totalorder %s90, %s91
    %p102 = scmp.eq.s32.totalorder %s14, 0
    %p103 = por %p101, %p102
    %p104 = scmp.ne.s32.totalorder %s90, %s91
    %p105 = scmp.eq.s32.totalorder %s15, 1
    %p106 = por %p104, %p105
    %p108 = scmp.ne.s32.totalorder %s91, %s107
    %p109 = scmp.eq.s32.totalorder %s15, 0
    %p110 = por %p108, %p109
    %p111 = scmp.le.s32.totalorder 1, %s9
    %p112 = scmp.lt.s32.totalorder %s9, 3
    %p113 = pnand %p111, %p112
    %p114 = pneg %p113
    // Predicated region
    $region9: #{mnist_logistic_forward.1} parent=5 // pred_check
      _
    $region10: #{mnist_logistic_forward.1} parent=5 // pred_check_branch
      %116 = sbr.rel (%p113) target = $region12
    $region11: #{mnist_logistic_forward.1} parent=5 // pred_region
      %s117 = ssub.s32 %s9, 1
      // Predicated region
      $region13: #{mnist_logistic_forward.1} parent=11 // pred_check
        %p118 = pneg %p56
      $region14: #{mnist_logistic_forward.1} parent=11 // pred_check_branch
        %120 = sbr.rel (%p118) target = $region16
      $region15: #{mnist_logistic_forward.1} parent=11 // pred_region
        _
      $region16: #{mnist_logistic_forward.1} parent=11 // pred_fallthru
        _
      // Predicated region
      $region17: #{mnist_logistic_forward.1} parent=11 // pred_check
        %p121 = pneg %p77
      $region18: #{mnist_logistic_forward.1} parent=11 // pred_check_branch
        %123 = sbr.rel (%p121) target = $region20
      $region19: #{mnist_logistic_forward.1} parent=11 // pred_region
        _
      $region20: #{mnist_logistic_forward.1} parent=11 // pred_fallthru
        _
    $region12: #{mnist_logistic_forward.1} parent=5 // pred_fallthru
      _
    %p124 = scmp.lt.s32.totalorder %s9, 2
    // Predicated region
    $region21: #{mnist_logistic_forward.1} parent=5 // pred_check
      %p125 = pneg %p124
    $region22: #{mnist_logistic_forward.1} parent=5 // pred_check_branch
      %127 = sbr.rel (%p125) target = $region24
    $region23: #{mnist_logistic_forward.1} parent=5 // pred_region
      // Predicated region
      $region25: #{mnist_logistic_forward.1} parent=23 // pred_check
        %p128 = pneg %p29
      $region26: #{mnist_logistic_forward.1} parent=23 // pred_check_branch
        %130 = sbr.rel (%p128) target = $region28
      $region27: #{mnist_logistic_forward.1} parent=23 // pred_region
        %s131 = smul.u32 4, %s9
        %p132 = scmp.lt.s32.totalorder %s131, 7
        %s133 = scalar_select %p132, %s131, 7
        %s134 = smul.addr %s133, 7
        %s135 = smul.addr %s134, 8
        %s136 = scalar_lea.vmem %s0, %s135
        %s137 = smul.u32 4, %s9
      $region28: #{mnist_logistic_forward.1} parent=23 // pred_fallthru
        _
    $region24: #{mnist_logistic_forward.1} parent=5 // pred_fallthru
      _
    %p138 = scmp.le.s32.totalorder 1, %s9
    %p139 = scmp.lt.s32.totalorder %s9, 3
    %p140 = pnand %p138, %p139
    %p141 = pneg %p140
    // Predicated region
    $region29: #{mnist_logistic_forward.1} parent=5 // pred_check
      _
    $region30: #{mnist_logistic_forward.1} parent=5 // pred_check_branch
      %143 = sbr.rel (%p140) target = $region32
    $region31: #{mnist_logistic_forward.1} parent=5 // pred_region
      %s144 = ssub.s32 %s9, 1
      %s145 = smul.u32 4, %s14
      %p146 = scmp.lt.s32.totalorder %s145, 7
      %s147 = scalar_select %p146, %s145, 7
      %s148 = smul.addr %s147, 7
      %s149 = smul.addr %s148, 8
      %s150 = scalar_lea.vmem %s0, %s149
      %p151 = pneg %p35
      %p152 = pneg %p32
      %p153 = pneg %p56
      %p154 = pneg %p53
      %p155 = pneg %p77
      %p156 = pneg %p74
      %p157 = pneg %p103
      %p158 = pneg %p100
      %s159 = smul.u32 4, %s14
      %p160 = scmp.lt.s32.totalorder %s159, 7
      %s161 = scalar_select %p160, %s159, 7
      %s162 = smul.addr %s161, 8
      %s163 = scalar_lea.vmem %s3, %s162
      %s164 = smul.u32 4, %s14
      %p165 = scmp.lt.s32.totalorder %s164, 7
      %s166 = scalar_select %p165, %s164, 7
      %s167 = smul.addr %s166, 7
      %s168 = smul.addr %s167, 8
      %s169 = scalar_lea.vmem %s0, %s168
      %s170 = smul.u32 4, %s14
      %s171 = smul.u32 4, %s14
      %p172 = scmp.lt.s32.totalorder %s171, 7
      %s173 = scalar_select %p172, %s171, 7
      %s174 = smul.addr %s173, 8
      %s175 = scalar_lea.vmem %s3, %s174
      %s176 = smul.u32 4, %s14
      %v177 = vld [vmem:[%s169] sm:$0xff]
      %v178 = vld [vmem:[%s169 + $0x8] sm:$0xff]
      %v179 = vld [vmem:[%s169 + $0x10] sm:$0xff]
      %v180 = vld [vmem:[%s169 + $0x18] sm:$0xff]
      %v181 = vld [vmem:[%s169 + $0x20] sm:$0xff]
      %v182 = vld [vmem:[%s169 + $0x28] sm:$0xff]
      %v183 = vld [vmem:[%s169 + $0x30] sm:$0xff]
      %v184 = vld [vmem:[%s169 + $0x38] sm:$0xff]
      %v185 = vld [vmem:[%s169 + $0x40] sm:$0xff]
      %v186 = vld [vmem:[%s169 + $0x48] sm:$0xff]
      %v187 = vld [vmem:[%s169 + $0x50] sm:$0xff]
      %v188 = vld [vmem:[%s169 + $0x58] sm:$0xff]
      %v189 = vld [vmem:[%s169 + $0x60] sm:$0xff]
      %v190 = vld [vmem:[%s169 + $0x68] sm:$0xff]
      %v191 = vld [vmem:[%s169 + $0x70] sm:$0xff]
      %v192 = vld [vmem:[%s169 + $0x78] sm:$0xff]
      %v193 = vld [vmem:[%s169 + $0x80] sm:$0xff]
      %v194 = vld [vmem:[%s169 + $0x88] sm:$0xff]
      %v195 = vld [vmem:[%s169 + $0x90] sm:$0xff]
      %v196 = vld [vmem:[%s169 + $0x98] sm:$0xff]
      %v197 = vld [vmem:[%s169 + $0xa0] sm:$0xff]
      %v198 = vld [vmem:[%s169 + $0xa8] sm:$0xff]
      %v199 = vld [vmem:[%s169 + $0xb0] sm:$0xff]
      %v200 = vld [vmem:[%s169 + $0xb8] sm:$0xff]
      %v201 = vld [vmem:[%s169 + $0xc0] sm:$0xff]
      %v202 = vld [vmem:[%s169 + $0xc8] sm:$0xff]
      %v203 = vld [vmem:[%s169 + $0xd0] sm:$0xff]
      %v204 = vld [vmem:[%s169 + $0xd8] sm:$0xff]
      %v205 = vld [vmem:[%s1] sm:$0xff]
      %v206 = vld [vmem:[%s1 + $0x8] sm:$0xff]
      %v207 = vld [vmem:[%s1 + $0x10] sm:$0xff]
      %v208 = vld [vmem:[%s1 + $0x18] sm:$0xff]
      %v209 = vld [vmem:[%s1 + $0x20] sm:$0xff]
      %v210 = vld [vmem:[%s1 + $0x28] sm:$0xff]
      %v211 = vld [vmem:[%s1 + $0x30] sm:$0xff]
      %v212 = vld [vmem:[%s1 + $0x38] sm:$0xff]
      %v213 = vld [vmem:[%s1 + $0x40] sm:$0xff]
      %v214 = vld [vmem:[%s1 + $0x48] sm:$0xff]
      %v215 = vld [vmem:[%s1 + $0x50] sm:$0xff]
      %v216 = vld [vmem:[%s1 + $0x58] sm:$0xff]
      %v217 = vld [vmem:[%s1 + $0x60] sm:$0xff]
      %v218 = vld [vmem:[%s1 + $0x68] sm:$0xff]
      %v219 = vld [vmem:[%s1 + $0x70] sm:$0xff]
      %v220 = vld [vmem:[%s1 + $0x78] sm:$0xff]
      %v221 = vld [vmem:[%s1 + $0x80] sm:$0xff]
      %v222 = vld [vmem:[%s1 + $0x88] sm:$0xff]
      %v223 = vld [vmem:[%s1 + $0x90] sm:$0xff]
      %v224 = vld [vmem:[%s1 + $0x98] sm:$0xff]
      %v225 = vld [vmem:[%s1 + $0xa0] sm:$0xff]
      %v226 = vld [vmem:[%s1 + $0xa8] sm:$0xff]
      %v227 = vld [vmem:[%s1 + $0xb0] sm:$0xff]
      %v228 = vld [vmem:[%s1 + $0xb8] sm:$0xff]
      %v229 = vld [vmem:[%s1 + $0xc0] sm:$0xff]
      %v230 = vld [vmem:[%s1 + $0xc8] sm:$0xff]
      %v231 = vld [vmem:[%s1 + $0xd0] sm:$0xff]
      %v232 = vld [vmem:[%s1 + $0xd8] sm:$0xff]
      %v233 = vld [vmem:[%s1 + $0xe0] sm:$0xff]
      %v234 = vld [vmem:[%s1 + $0xe8] sm:$0xff]
      %v235 = vld [vmem:[%s1 + $0xf0] sm:$0xff]
      %v236 = vld [vmem:[%s1 + $0xf8] sm:$0xff]
      %v237 = vld [vmem:[%s1 + $0x100] sm:$0xff]
      %v238 = vld [vmem:[%s1 + $0x108] sm:$0xff]
      %v239 = vld [vmem:[%s1 + $0x110] sm:$0xff]
      %v240 = vld [vmem:[%s1 + $0x118] sm:$0xff]
      %v241 = vld [vmem:[%s1 + $0x120] sm:$0xff]
      %v242 = vld [vmem:[%s1 + $0x128] sm:$0xff]
      %v243 = vld [vmem:[%s1 + $0x130] sm:$0xff]
      %v244 = vld [vmem:[%s1 + $0x138] sm:$0xff]
      %v245 = vld [vmem:[%s1 + $0x140] sm:$0xff]
      %v246 = vld [vmem:[%s1 + $0x148] sm:$0xff]
      %v247 = vld [vmem:[%s1 + $0x150] sm:$0xff]
      %v248 = vld [vmem:[%s1 + $0x158] sm:$0xff]
      %v249 = vld [vmem:[%s1 + $0x160] sm:$0xff]
      %v250 = vld [vmem:[%s1 + $0x168] sm:$0xff]
      %v251 = vld [vmem:[%s1 + $0x170] sm:$0xff]
      %v252 = vld [vmem:[%s1 + $0x178] sm:$0xff]
      %v253 = vld [vmem:[%s1 + $0x180] sm:$0xff]
      %v254 = vld [vmem:[%s1 + $0x188] sm:$0xff]
      %v255 = vld [vmem:[%s1 + $0x190] sm:$0xff]
      %v256 = vld [vmem:[%s1 + $0x198] sm:$0xff]
      %v257 = vld [vmem:[%s1 + $0x1a0] sm:$0xff]
      %v258 = vld [vmem:[%s1 + $0x1a8] sm:$0xff]
      %v259 = vld [vmem:[%s1 + $0x1b0] sm:$0xff]
      %v260 = vld [vmem:[%s1 + $0x1b8] sm:$0xff]
      %v261 = vld [vmem:[%s1 + $0x1c0] sm:$0xff]
      %v262 = vld [vmem:[%s1 + $0x1c8] sm:$0xff]
      %v263 = vld [vmem:[%s1 + $0x1d0] sm:$0xff]
      %v264 = vld [vmem:[%s1 + $0x1d8] sm:$0xff]
      %v265 = vld [vmem:[%s1 + $0x1e0] sm:$0xff]
      %v266 = vld [vmem:[%s1 + $0x1e8] sm:$0xff]
      %v267 = vld [vmem:[%s1 + $0x1f0] sm:$0xff]
      %v268 = vld [vmem:[%s1 + $0x1f8] sm:$0xff]
      %v269 = vld [vmem:[%s1 + $0x200] sm:$0xff]
      %v270 = vld [vmem:[%s1 + $0x208] sm:$0xff]
      %v271 = vld [vmem:[%s1 + $0x210] sm:$0xff]
      %v272 = vld [vmem:[%s1 + $0x218] sm:$0xff]
      %v273 = vld [vmem:[%s1 + $0x220] sm:$0xff]
      %v274 = vld [vmem:[%s1 + $0x228] sm:$0xff]
      %v275 = vld [vmem:[%s1 + $0x230] sm:$0xff]
      %v276 = vld [vmem:[%s1 + $0x238] sm:$0xff]
      %v277 = vld [vmem:[%s1 + $0x240] sm:$0xff]
      %v278 = vld [vmem:[%s1 + $0x248] sm:$0xff]
      %v279 = vld [vmem:[%s1 + $0x250] sm:$0xff]
      %v280 = vld [vmem:[%s1 + $0x258] sm:$0xff]
      %v281 = vld [vmem:[%s1 + $0x260] sm:$0xff]
      %v282 = vld [vmem:[%s1 + $0x268] sm:$0xff]
      %v283 = vld [vmem:[%s1 + $0x270] sm:$0xff]
      %v284 = vld [vmem:[%s1 + $0x278] sm:$0xff]
      %v285 = vld [vmem:[%s1 + $0x280] sm:$0xff]
      %v286 = vld [vmem:[%s1 + $0x288] sm:$0xff]
      %v287 = vld [vmem:[%s1 + $0x290] sm:$0xff]
      %v288 = vld [vmem:[%s1 + $0x298] sm:$0xff]
      %v289 = vld [vmem:[%s1 + $0x2a0] sm:$0xff]
      %v290 = vld [vmem:[%s1 + $0x2a8] sm:$0xff]
      %v291 = vld [vmem:[%s1 + $0x2b0] sm:$0xff]
      %v292 = vld [vmem:[%s1 + $0x2b8] sm:$0xff]
      %v293 = vld [vmem:[%s1 + $0x2c0] sm:$0xff]
      %v294 = vld [vmem:[%s1 + $0x2c8] sm:$0xff]
      %v295 = vld [vmem:[%s1 + $0x2d0] sm:$0xff]
      %v296 = vld [vmem:[%s1 + $0x2d8] sm:$0xff]
      %v297 = vld [vmem:[%s1 + $0x2e0] sm:$0xff]
      %v298 = vld [vmem:[%s1 + $0x2e8] sm:$0xff]
      %v299 = vld [vmem:[%s1 + $0x2f0] sm:$0xff]
      %v300 = vld [vmem:[%s1 + $0x2f8] sm:$0xff]
      %v301 = vld [vmem:[%s1 + $0x300] sm:$0xff]
      %v302 = vld [vmem:[%s1 + $0x308] sm:$0xff]
      %v303 = vld [vmem:[%s2] sm:$0x1]
      %v305 = vperm.slane %v303, 0
      %vm307 = vcmask 130048
      %v309 = vsel %vm307, %v183, 0
      %v312 = vsel %vm307, %v190, 0
      %v315 = vsel %vm307, %v197, 0
      %v318 = vsel %vm307, %v204, 0
      %320 = vmatpush.msra.mxu0 %v220
      %321 = vmatpush.msra.mxu0 %v219
      %322 = vmatpush.msra.mxu0 %v218
      %323 = vmatpush.msra.mxu0 %v217
      %324 = vmatpush.msra.mxu0 %v216
      %325 = vmatpush.msra.mxu0 %v215
      %326 = vmatpush.msra.mxu0 %v214
      %327 = vmatpush.msra.mxu0 %v213
      %328 = vmatpush.msra.mxu0 %v212
      %329 = vmatpush.msra.mxu0 %v211
      %330 = vmatpush.msra.mxu0 %v210
      %331 = vmatpush.msra.mxu0 %v209
      %332 = vmatpush.msra.mxu0 %v208
      %333 = vmatpush.msra.mxu0 %v207
      %334 = vmatpush.msra.mxu0 %v206
      %335 = vmatpush.msra.mxu0 %v205
      %336 = vmatmul.f32.gmra.mxu0 %v177
      %v337 = vpop.f32.mrf.mxu0
      %v338 = vadd.f32 %v305, %v337
      %339 = vmatmul.f32.gmra.mxu0 %v184
      %v340 = vpop.f32.mrf.mxu0
      %v341 = vadd.f32 %v305, %v340
      %342 = vmatmul.f32.gmra.mxu0 %v191
      %v343 = vpop.f32.mrf.mxu0
      %v344 = vadd.f32 %v305, %v343
      %345 = vmatmul.f32.gmra.mxu0 %v198
      %v346 = vpop.f32.mrf.mxu0
      %v347 = vadd.f32 %v305, %v346
      %348 = vdwg.mxu0
      %349 = vmatpush.msra.mxu0 %v236
      %350 = vmatpush.msra.mxu0 %v235
      %351 = vmatpush.msra.mxu0 %v234
      %352 = vmatpush.msra.mxu0 %v233
      %353 = vmatpush.msra.mxu0 %v232
      %354 = vmatpush.msra.mxu0 %v231
      %355 = vmatpush.msra.mxu0 %v230
      %356 = vmatpush.msra.mxu0 %v229
      %357 = vmatpush.msra.mxu0 %v228
      %358 = vmatpush.msra.mxu0 %v227
      %359 = vmatpush.msra.mxu0 %v226
      %360 = vmatpush.msra.mxu0 %v225
      %361 = vmatpush.msra.mxu0 %v224
      %362 = vmatpush.msra.mxu0 %v223
      %363 = vmatpush.msra.mxu0 %v222
      %364 = vmatpush.msra.mxu0 %v221
      %365 = vmatmul.f32.gmra.mxu0 %v178
      %v366 = vpop.f32.mrf.mxu0
      %v367 = vadd.f32 %v338, %v366
      %368 = vmatmul.f32.gmra.mxu0 %v185
      %v369 = vpop.f32.mrf.mxu0
      %v370 = vadd.f32 %v341, %v369
      %371 = vmatmul.f32.gmra.mxu0 %v192
      %v372 = vpop.f32.mrf.mxu0
      %v373 = vadd.f32 %v344, %v372
      %374 = vmatmul.f32.gmra.mxu0 %v199
      %v375 = vpop.f32.mrf.mxu0
      %v376 = vadd.f32 %v347, %v375
      %377 = vdwg.mxu0
      %378 = vmatpush.msra.mxu0 %v252
      %379 = vmatpush.msra.mxu0 %v251
      %380 = vmatpush.msra.mxu0 %v250
      %381 = vmatpush.msra.mxu0 %v249
      %382 = vmatpush.msra.mxu0 %v248
      %383 = vmatpush.msra.mxu0 %v247
      %384 = vmatpush.msra.mxu0 %v246
      %385 = vmatpush.msra.mxu0 %v245
      %386 = vmatpush.msra.mxu0 %v244
      %387 = vmatpush.msra.mxu0 %v243
      %388 = vmatpush.msra.mxu0 %v242
      %389 = vmatpush.msra.mxu0 %v241
      %390 = vmatpush.msra.mxu0 %v240
      %391 = vmatpush.msra.mxu0 %v239
      %392 = vmatpush.msra.mxu0 %v238
      %393 = vmatpush.msra.mxu0 %v237
      %394 = vmatmul.f32.gmra.mxu0 %v179
      %v395 = vpop.f32.mrf.mxu0
      %v396 = vadd.f32 %v367, %v395
      %397 = vmatmul.f32.gmra.mxu0 %v186
      %v398 = vpop.f32.mrf.mxu0
      %v399 = vadd.f32 %v370, %v398
      %400 = vmatmul.f32.gmra.mxu0 %v193
      %v401 = vpop.f32.mrf.mxu0
      %v402 = vadd.f32 %v373, %v401
      %403 = vmatmul.f32.gmra.mxu0 %v200
      %v404 = vpop.f32.mrf.mxu0
      %v405 = vadd.f32 %v376, %v404
      %406 = vdwg.mxu0
      %407 = vmatpush.msra.mxu0 %v268
      %408 = vmatpush.msra.mxu0 %v267
      %409 = vmatpush.msra.mxu0 %v266
      %410 = vmatpush.msra.mxu0 %v265
      %411 = vmatpush.msra.mxu0 %v264
      %412 = vmatpush.msra.mxu0 %v263
      %413 = vmatpush.msra.mxu0 %v262
      %414 = vmatpush.msra.mxu0 %v261
      %415 = vmatpush.msra.mxu0 %v260
      %416 = vmatpush.msra.mxu0 %v259
      %417 = vmatpush.msra.mxu0 %v258
      %418 = vmatpush.msra.mxu0 %v257
      %419 = vmatpush.msra.mxu0 %v256
      %420 = vmatpush.msra.mxu0 %v255
      %421 = vmatpush.msra.mxu0 %v254
      %422 = vmatpush.msra.mxu0 %v253
      %423 = vmatmul.f32.gmra.mxu0 %v180
      %v424 = vpop.f32.mrf.mxu0
      %v425 = vadd.f32 %v396, %v424
      %426 = vmatmul.f32.gmra.mxu0 %v187
      %v427 = vpop.f32.mrf.mxu0
      %v428 = vadd.f32 %v399, %v427
      %429 = vmatmul.f32.gmra.mxu0 %v194
      %v430 = vpop.f32.mrf.mxu0
      %v431 = vadd.f32 %v402, %v430
      %432 = vmatmul.f32.gmra.mxu0 %v201
      %v433 = vpop.f32.mrf.mxu0
      %v434 = vadd.f32 %v405, %v433
      %435 = vdwg.mxu0
      %436 = vmatpush.msra.mxu0 %v284
      %437 = vmatpush.msra.mxu0 %v283
      %438 = vmatpush.msra.mxu0 %v282
      %439 = vmatpush.msra.mxu0 %v281
      %440 = vmatpush.msra.mxu0 %v280
      %441 = vmatpush.msra.mxu0 %v279
      %442 = vmatpush.msra.mxu0 %v278
      %443 = vmatpush.msra.mxu0 %v277
      %444 = vmatpush.msra.mxu0 %v276
      %445 = vmatpush.msra.mxu0 %v275
      %446 = vmatpush.msra.mxu0 %v274
      %447 = vmatpush.msra.mxu0 %v273
      %448 = vmatpush.msra.mxu0 %v272
      %449 = vmatpush.msra.mxu0 %v271
      %450 = vmatpush.msra.mxu0 %v270
      %451 = vmatpush.msra.mxu0 %v269
      %452 = vmatmul.f32.gmra.mxu0 %v181
      %v453 = vpop.f32.mrf.mxu0
      %v454 = vadd.f32 %v425, %v453
      %455 = vmatmul.f32.gmra.mxu0 %v188
      %v456 = vpop.f32.mrf.mxu0
      %v457 = vadd.f32 %v428, %v456
      %458 = vmatmul.f32.gmra.mxu0 %v195
      %v459 = vpop.f32.mrf.mxu0
      %v460 = vadd.f32 %v431, %v459
      %461 = vmatmul.f32.gmra.mxu0 %v202
      %v462 = vpop.f32.mrf.mxu0
      %v463 = vadd.f32 %v434, %v462
      %464 = vdwg.mxu0
      %465 = vmatpush.msra.mxu0 %v300
      %466 = vmatpush.msra.mxu0 %v299
      %467 = vmatpush.msra.mxu0 %v298
      %468 = vmatpush.msra.mxu0 %v297
      %469 = vmatpush.msra.mxu0 %v296
      %470 = vmatpush.msra.mxu0 %v295
      %471 = vmatpush.msra.mxu0 %v294
      %472 = vmatpush.msra.mxu0 %v293
      %473 = vmatpush.msra.mxu0 %v292
      %474 = vmatpush.msra.mxu0 %v291
      %475 = vmatpush.msra.mxu0 %v290
      %476 = vmatpush.msra.mxu0 %v289
      %477 = vmatpush.msra.mxu0 %v288
      %478 = vmatpush.msra.mxu0 %v287
      %479 = vmatpush.msra.mxu0 %v286
      %480 = vmatpush.msra.mxu0 %v285
      %481 = vmatmul.f32.gmra.mxu0 %v182
      %v482 = vpop.f32.mrf.mxu0
      %v483 = vadd.f32 %v454, %v482
      %484 = vmatmul.f32.gmra.mxu0 %v189
      %v485 = vpop.f32.mrf.mxu0
      %v486 = vadd.f32 %v457, %v485
      %487 = vmatmul.f32.gmra.mxu0 %v196
      %v488 = vpop.f32.mrf.mxu0
      %v489 = vadd.f32 %v460, %v488
      %490 = vmatmul.f32.gmra.mxu0 %v203
      %v491 = vpop.f32.mrf.mxu0
      %v492 = vadd.f32 %v463, %v491
      %493 = vdwg.mxu0
      %494 = vmatpush.msra.mxu0 0.0
      %495 = vmatpush.msra.mxu0 0.0
      %496 = vmatpush.msra.mxu0 0.0
      %497 = vmatpush.msra.mxu0 0.0
      %498 = vmatpush.msra.mxu0 0.0
      %499 = vmatpush.msra.mxu0 0.0
      %500 = vmatpush.msra.mxu0 0.0
      %501 = vmatpush.msra.mxu0 0.0
      %502 = vmatpush.msra.mxu0 0.0
      %503 = vmatpush.msra.mxu0 0.0
      %504 = vmatpush.msra.mxu0 0.0
      %505 = vmatpush.msra.mxu0 0.0
      %506 = vmatpush.msra.mxu0 0.0
      %507 = vmatpush.msra.mxu0 0.0
      %508 = vmatpush.msra.mxu0 %v302
      %509 = vmatpush.msra.mxu0 %v301
      %510 = vmatmul.f32.gmra.mxu0 %v309
      %v511 = vpop.f32.mrf.mxu0
      %v512 = vadd.f32 %v483, %v511
      %513 = vmatmul.f32.gmra.mxu0 %v312
      %v514 = vpop.f32.mrf.mxu0
      %v515 = vadd.f32 %v486, %v514
      %516 = vmatmul.f32.gmra.mxu0 %v315
      %v517 = vpop.f32.mrf.mxu0
      %v518 = vadd.f32 %v489, %v517
      %519 = vmatmul.f32.gmra.mxu0 %v318
      %v520 = vpop.f32.mrf.mxu0
      %v521 = vadd.f32 %v492, %v520
      %522 = vdwg.mxu0
      %523 = vst.msk [vmem:[%s175] sm:$0xff] %vm307, %v512
      %524 = vst.msk [vmem:[%s175 + $0x8] sm:$0xff] %vm307, %v515
      %525 = vst.msk [vmem:[%s175 + $0x10] sm:$0xff] %vm307, %v518
      %526 = vst.msk [vmem:[%s175 + $0x18] sm:$0xff] %vm307, %v521
      %s527 = smul.u32 4, %s14
      %p528 = scmp.lt.s32.totalorder %s527, 7
      %s529 = scalar_select %p528, %s527, 7
      %s530 = smul.addr %s529, 8
      %s531 = scalar_lea.vmem %s3, %s530
      // Predicated region
      $region33: #{mnist_logistic_forward.1} parent=31 // pred_check
        %p532 = pneg %p100
      $region34: #{mnist_logistic_forward.1} parent=31 // pred_check_branch
        %534 = sbr.rel (%p532) target = $region36
      $region35: #{mnist_logistic_forward.1} parent=31 // pred_region
        %s535 = smul.u32 4, %s14
      $region36: #{mnist_logistic_forward.1} parent=31 // pred_fallthru
        _
    $region32: #{mnist_logistic_forward.1} parent=5 // pred_fallthru
      _
    %p536 = scmp.le.s32.totalorder 2, %s9
    // Predicated region
    $region37: #{mnist_logistic_forward.1} parent=5 // pred_check
      %p537 = pneg %p536
    $region38: #{mnist_logistic_forward.1} parent=5 // pred_check_branch
      %539 = sbr.rel (%p537) target = $region40
    $region39: #{mnist_logistic_forward.1} parent=5 // pred_region
      %s540 = ssub.s32 %s9, 2
      // Predicated region
      $region41: #{mnist_logistic_forward.1} parent=39 // pred_check
        %p541 = pneg %p106
      $region42: #{mnist_logistic_forward.1} parent=39 // pred_check_branch
        %543 = sbr.rel (%p541) target = $region44
      $region43: #{mnist_logistic_forward.1} parent=39 // pred_region
        %s544 = smul.u32 4, %s15
        %p545 = scmp.lt.s32.totalorder %s544, 7
        %s546 = scalar_select %p545, %s544, 7
        %s547 = smul.addr %s546, 8
        %s548 = scalar_lea.vmem %s3, %s547
      $region44: #{mnist_logistic_forward.1} parent=39 // pred_fallthru
        _
    $region40: #{mnist_logistic_forward.1} parent=5 // pred_fallthru
      _
  $region6: #{mnist_logistic_forward.1} parent=0 // loop_footer
    %s13 = sadd.s32 1, %s9
  $region7: #{mnist_logistic_forward.1} parent=0 // loop_footer_branch
    %8 = sbr.rel target = $region3
  $region8: #{mnist_logistic_forward.1} parent=0 // loop_exit
    _

</llo_original>
